<compile_context>
chip_gen: v6e
topology: v6e:2x2x1
jax: 0.10.0
libtpu: 0.0.40
codegen_flags: <defaults>
</compile_context>

<pallas_src>
import functools

import jax
import jax.numpy as jnp
from jax.experimental import pallas as pl
from jax.experimental.pallas import tpu as pltpu


def actor_kernel(obs_ref, w1_ref, b1_ref, wh_ref, bh_ref, out_ref, *, bound):
    obs = obs_ref[...]                                       # (TB, n_states) f32

    # Hidden layer: Linear(n_states, 128) + ReLU (double ReLU == single ReLU).
    h = jnp.dot(obs, w1_ref[...], preferred_element_type=jnp.float32) + b1_ref[...]
    h = jnp.maximum(h, 0.0)                                  # (TB, 128)

    # Fused heads: one (128, 2) projection -> column 0 = mu logits, col 1 = sigma.
    heads = jnp.dot(h, wh_ref[...], preferred_element_type=jnp.float32) + bh_ref[...]

    # Apply per-column nonlinearity without lane-1 slicing: select by lane index.
    col = jax.lax.broadcasted_iota(jnp.int32, heads.shape, dimension=1)
    mu_all = bound * jnp.tanh(heads)                         # cheap: only 2 lanes wide
    sg_all = jnp.logaddexp(0.0, heads)                       # stable softplus
    out_ref[...] = jnp.where(col == 0, mu_all, sg_all)       # (TB, 2)


def _round_up(x, m):
    return ((x + m - 1) // m) * m


def actor_forward(obs, w1, b1, wmu, bmu, wsg, bsg, bound, *, batch_tile=1024):
    """Returns (mu, sigma), each (B, 1) float32."""
    obs = jnp.asarray(obs, jnp.float32)
    B, n_states = obs.shape
    hidden = w1.shape[1]

    # Fuse the two heads: (128, 2) weight, (1, 2) bias.
    wh = jnp.concatenate([wmu, wsg], axis=1)
    bh = jnp.concatenate([bmu, bsg], axis=1)

    # Batch tiling: tile must be a multiple of 8 (sublane); pad B up to a
    # multiple of the tile so every grid step sees a full block.
    tb = min(batch_tile, _round_up(B, 8))
    b_pad = _round_up(B, tb)
    if b_pad != B:
        obs = jnp.pad(obs, ((0, b_pad - B), (0, 0)))

    grid = (b_pad // tb,)

    out = pl.pallas_call(
        functools.partial(actor_kernel, bound=float(bound)),
        out_shape=jax.ShapeDtypeStruct((b_pad, 2), jnp.float32),
        grid_spec=pltpu.PrefetchScalarGridSpec(
            num_scalar_prefetch=0,
            grid=grid,
            in_specs=[
                pl.BlockSpec((tb, n_states), lambda i: (i, 0)),   # obs (tiled)
                pl.BlockSpec((n_states, hidden), lambda i: (0, 0)),  # W1 (resident)
                pl.BlockSpec((1, hidden), lambda i: (0, 0)),      # b1 (resident)
                pl.BlockSpec((hidden, 2), lambda i: (0, 0)),      # fused head W
                pl.BlockSpec((1, 2), lambda i: (0, 0)),           # fused head b
            ],
            out_specs=pl.BlockSpec((tb, 2), lambda i: (i, 0)),
        ),
        compiler_params=pltpu.CompilerParams(
            dimension_semantics=("parallel",),
        ),
    )(obs, w1, b1, wh, bh)

    out = out[:B]
    mu = out[:, 0:1]
    sigma = out[:, 1:2]
    return mu, sigma


def make_params(key, n_states, hidden=128):
    # Deterministic synthetic init (uniform, PyTorch-Linear-like fan-in scaling).
    ks = jax.random.split(key, 6)

    def u(k, shape, fan_in):
        lim = 1.0 / jnp.sqrt(jnp.float32(fan_in))
        return jax.random.uniform(k, shape, jnp.float32, -lim, lim)

    w1 = u(ks[0], (n_states, hidden), n_states)   # stored transposed vs torch
    b1 = u(ks[1], (1, hidden), n_states)
    wmu = u(ks[2], (hidden, 1), hidden)
    bmu = u(ks[3], (1, 1), hidden)
    wsg = u(ks[4], (hidden, 1), hidden)
    bsg = u(ks[5], (1, 1), hidden)
    return w1, b1, wmu, bmu, wsg, bsg


if __name__ == "__main__":
    n_states = 3          # e.g. Pendulum observation dim
    bound = 2.0           # action bound
    batch = 8             # small demo batch (not a multiple of the tile -> padded)

    key = jax.random.PRNGKey(0)
    k_obs, k_par = jax.random.split(key)
    obs = jax.random.normal(k_obs, (batch, n_states), jnp.float32)
    params = make_params(k_par, n_states)

    mu, sigma = actor_forward(obs, *params, bound=bound)
    jax.block_until_ready((mu, sigma))

    # Reference check in plain JAX.
    w1, b1, wmu, bmu, wsg, bsg = params
    h_ref = jnp.maximum(obs @ w1 + b1, 0.0)
    mu_ref = bound * jnp.tanh(h_ref @ wmu + bmu)
    sg_ref = jnp.logaddexp(0.0, h_ref @ wsg + bsg)
    assert mu.shape == (batch, 1) and sigma.shape == (batch, 1)
    assert jnp.allclose(mu, mu_ref, atol=1e-5), "mu mismatch"
    assert jnp.allclose(sigma, sg_ref, atol=1e-5), "sigma mismatch"

    print("KERNEL_OK")
</pallas_src>

<mosaic_0001>
module attributes {stable_mosaic.version = 11 : i64} {
  func.func @actor_kernel(%arg0: i32, %arg1: memref<8x3xf32, #tpu.memory_space<vmem>>, %arg2: memref<3x128xf32, #tpu.memory_space<vmem>>, %arg3: memref<1x128xf32, #tpu.memory_space<vmem>>, %arg4: memref<128x2xf32, #tpu.memory_space<vmem>>, %arg5: memref<1x2xf32, #tpu.memory_space<vmem>>, %arg6: memref<8x2xf32, #tpu.memory_space<vmem>>) attributes {dimension_semantics = [#tpu.dimension_semantics<parallel>], iteration_bounds = array<i64: 1>, scalar_prefetch = 0 : i64, scratch_operands = 0 : i64, tpu.core_type = #tpu.core_type<tc>, window_params = [{transform_indices = @transform_0, window_bounds = array<i64: 8, 3>}, {pipeline_mode = #tpu.pipeline_mode<synchronous>, transform_indices = @transform_1, window_bounds = array<i64: 3, 128>}, {pipeline_mode = #tpu.pipeline_mode<synchronous>, transform_indices = @transform_2, window_bounds = array<i64: 1, 128>}, {pipeline_mode = #tpu.pipeline_mode<synchronous>, transform_indices = @transform_3, window_bounds = array<i64: 128, 2>}, {pipeline_mode = #tpu.pipeline_mode<synchronous>, transform_indices = @transform_4, window_bounds = array<i64: 1, 2>}, {transform_indices = @transform_5, window_bounds = array<i64: 8, 2>}]} {
    %c0 = arith.constant 0 : index
    %c0_0 = arith.constant 0 : index
    %0 = vector.load %arg1[%c0, %c0_0] : memref<8x3xf32, #tpu.memory_space<vmem>>, vector<8x3xf32>
    %c0_1 = arith.constant 0 : index
    %c0_2 = arith.constant 0 : index
    %1 = vector.load %arg2[%c0_1, %c0_2] : memref<3x128xf32, #tpu.memory_space<vmem>>, vector<3x128xf32>
    %cst = arith.constant dense<0.000000e+00> : vector<8x128xf32>
    %2 = tpu.matmul %0, %1, %cst {dimension_numbers = #tpu.dot_dimension_numbers<[1], [0], [0], [1], [0, 0, 1, 1], [], []>} : vector<8x3xf32>, vector<3x128xf32>, vector<8x128xf32> -> vector<8x128xf32>
    %c0_3 = arith.constant 0 : index
    %c0_4 = arith.constant 0 : index
    %3 = vector.load %arg3[%c0_3, %c0_4] : memref<1x128xf32, #tpu.memory_space<vmem>>, vector<1x128xf32>
    %4 = vector.broadcast %3 : vector<1x128xf32> to vector<8x128xf32>
    %5 = arith.addf %2, %4 : vector<8x128xf32>
    %cst_5 = arith.constant 0.000000e+00 : f32
    %6 = vector.broadcast %cst_5 : f32 to vector<8x128xf32>
    %7 = arith.maximumf %5, %6 : vector<8x128xf32>
    %c0_6 = arith.constant 0 : index
    %c0_7 = arith.constant 0 : index
    %8 = vector.load %arg4[%c0_6, %c0_7] : memref<128x2xf32, #tpu.memory_space<vmem>>, vector<128x2xf32>
    %cst_8 = arith.constant dense<0.000000e+00> : vector<8x2xf32>
    %9 = tpu.matmul %7, %8, %cst_8 {dimension_numbers = #tpu.dot_dimension_numbers<[1], [0], [0], [1], [0, 0, 1, 1], [], []>} : vector<8x128xf32>, vector<128x2xf32>, vector<8x2xf32> -> vector<8x2xf32>
    %c0_9 = arith.constant 0 : index
    %c0_10 = arith.constant 0 : index
    %10 = vector.load %arg5[%c0_9, %c0_10] : memref<1x2xf32, #tpu.memory_space<vmem>>, vector<1x2xf32>
    %11 = vector.broadcast %10 : vector<1x2xf32> to vector<8x2xf32>
    %12 = arith.addf %9, %11 : vector<8x2xf32>
    %13 = tpu.iota {dimensions = array<i32: 1>} : vector<8x2xi32>
    %14 = math.tanh %12 : vector<8x2xf32>
    %cst_11 = arith.constant 2.000000e+00 : f32
    %15 = vector.broadcast %cst_11 : f32 to vector<8x2xf32>
    %16 = arith.mulf %15, %14 : vector<8x2xf32>
    %cst_12 = arith.constant 0.000000e+00 : f32
    %17 = vector.broadcast %cst_12 : f32 to vector<8x2xf32>
    %18 = arith.maximumf %17, %12 : vector<8x2xf32>
    %19 = vector.broadcast %cst_12 : f32 to vector<8x2xf32>
    %20 = arith.subf %19, %12 : vector<8x2xf32>
    %21 = arith.cmpf one, %20, %20 : vector<8x2xf32>
    %22 = vector.broadcast %cst_12 : f32 to vector<8x2xf32>
    %23 = arith.addf %22, %12 : vector<8x2xf32>
    %24 = math.absf %20 : vector<8x2xf32>
    %cst_13 = arith.constant 0.000000e+00 : f32
    %25 = vector.broadcast %cst_13 : f32 to vector<8x2xf32>
    %26 = arith.subf %25, %24 : vector<8x2xf32>
    %27 = math.exp %26 : vector<8x2xf32>
    %28 = math.log1p %27 : vector<8x2xf32>
    %29 = arith.addf %18, %28 : vector<8x2xf32>
    %30 = arith.select %21, %23, %29 : vector<8x2xi1>, vector<8x2xf32>
    %c0_i32 = arith.constant 0 : i32
    %31 = vector.broadcast %c0_i32 : i32 to vector<8x2xi32>
    %32 = arith.cmpi eq, %13, %31 : vector<8x2xi32>
    %33 = arith.select %32, %16, %30 : vector<8x2xi1>, vector<8x2xf32>
    %c0_14 = arith.constant 0 : index
    %c0_15 = arith.constant 0 : index
    %34 = vector.load %arg6[%c0_14, %c0_15] : memref<8x2xf32, #tpu.memory_space<vmem>>, vector<8x2xf32>
    tpu.vector_store %arg6[%c0_14, %c0_15], %33 {strides = array<i32>} : memref<8x2xf32, #tpu.memory_space<vmem>>, vector<8x2xf32>,
    return
  }
  func.func @transform_0(%arg0: i32) -> (i32, i32) {
    %c0_i32 = arith.constant 0 : i32
    %c0_i32_0 = arith.constant 0 : i32
    return %arg0, %c0_i32 : i32, i32
  }
  func.func @transform_1(%arg0: i32) -> (i32, i32) {
    %c0_i32 = arith.constant 0 : i32
    %c0_i32_0 = arith.constant 0 : i32
    %c0_i32_1 = arith.constant 0 : i32
    return %c0_i32, %c0_i32_0 : i32, i32
  }
  func.func @transform_2(%arg0: i32) -> (i32, i32) {
    %c0_i32 = arith.constant 0 : i32
    %c0_i32_0 = arith.constant 0 : i32
    %c0_i32_1 = arith.constant 0 : i32
    return %c0_i32, %c0_i32_0 : i32, i32
  }
  func.func @transform_3(%arg0: i32) -> (i32, i32) {
    %c0_i32 = arith.constant 0 : i32
    %c0_i32_0 = arith.constant 0 : i32
    %c0_i32_1 = arith.constant 0 : i32
    return %c0_i32, %c0_i32_0 : i32, i32
  }
  func.func @transform_4(%arg0: i32) -> (i32, i32) {
    %c0_i32 = arith.constant 0 : i32
    %c0_i32_0 = arith.constant 0 : i32
    %c0_i32_1 = arith.constant 0 : i32
    return %c0_i32, %c0_i32_0 : i32, i32
  }
  func.func @transform_5(%arg0: i32) -> (i32, i32) {
    %c0_i32 = arith.constant 0 : i32
    %c0_i32_0 = arith.constant 0 : i32
    return %arg0, %c0_i32 : i32, i32
  }
}

</mosaic_0001>

<llo_original>
// kernel: tpu_custom_call.1
$region0: #{tpu_custom_call.1}
  #allocation0 [shape = 'u32[]', space=smem, size = 0x4, offset = 0x4, fixed_abs, tag = 'smem constant byte address 0x4 - core index']
  #allocation1 [shape = 'u32[144,128]{1,0:T(1,128)}', space=vmem, size = 0x12000, scoped, tag = 'internal scratch']
  %s0 = inlined_call_operand.vmem [shape: f32[8,3], index: 0, kind: input, shape index: {}]
  %s1 = inlined_call_operand.vmem [shape: f32[3,128], index: 1, kind: input, shape index: {}]
  %s2 = inlined_call_operand.vmem [shape: f32[1,128], index: 2, kind: input, shape index: {}]
  %s3 = inlined_call_operand.vmem [shape: f32[128,2], index: 3, kind: input, shape index: {}]
  %s4 = inlined_call_operand.vmem [shape: f32[1,2], index: 4, kind: input, shape index: {}]
  %s5 = inlined_call_operand.vmem [shape: f32[8,2], index: 5, kind: output, shape index: {}]
  %s6 = sld [smem:[#allocation0]]
  $region30: #{tpu_custom_call.1} parent=0
    _
  %s8 = ssub.s32 1, %s6
  %s9 = scalar_select 0, %s8, %s6
  // Predicated region
  $region2: #{tpu_custom_call.1} parent=0 // pred_check
    _
  $region3: #{tpu_custom_call.1} parent=0 // pred_check_branch
    %11 = sbr.rel (0) target = $region5
  $region4: #{tpu_custom_call.1} parent=0 // pred_region
    _
  $region5: #{tpu_custom_call.1} parent=0 // pred_fallthru
    _
  // Predicated region
  $region6: #{tpu_custom_call.1} parent=0 // pred_check
    _
  $region7: #{tpu_custom_call.1} parent=0 // pred_check_branch
    %13 = sbr.rel (0) target = $region9
  $region8: #{tpu_custom_call.1} parent=0 // pred_region
    _
  $region9: #{tpu_custom_call.1} parent=0 // pred_fallthru
    _
  // Predicated region
  $region10: #{tpu_custom_call.1} parent=0 // pred_check
    _
  $region11: #{tpu_custom_call.1} parent=0 // pred_check_branch
    %15 = sbr.rel (0) target = $region13
  $region12: #{tpu_custom_call.1} parent=0 // pred_region
    _
  $region13: #{tpu_custom_call.1} parent=0 // pred_fallthru
    _
  // Predicated region
  $region14: #{tpu_custom_call.1} parent=0 // pred_check
    _
  $region15: #{tpu_custom_call.1} parent=0 // pred_check_branch
    %17 = sbr.rel (0) target = $region17
  $region16: #{tpu_custom_call.1} parent=0 // pred_region
    _
  $region17: #{tpu_custom_call.1} parent=0 // pred_fallthru
    _
  // Predicated region
  $region18: #{tpu_custom_call.1} parent=0 // pred_check
    _
  $region19: #{tpu_custom_call.1} parent=0 // pred_check_branch
    %19 = sbr.rel (0) target = $region21
  $region20: #{tpu_custom_call.1} parent=0 // pred_region
    _
  $region21: #{tpu_custom_call.1} parent=0 // pred_fallthru
    _
  %v20 = vld [vmem:[%s0] sm:$0xff]
  %v21 = vld [vmem:[%s1] sm:$0x7]
  %v22 = vld [vmem:[%s2] sm:$0x1]
  %v24 = vlaneseq
  %v25 = vshrl.u32 %v24, 7
  %v26 = vsub.s32 0, %v25
  %v27 = vrot.slane %v22, %v26
  %vm29 = vcmask 23552
  %v31 = vsel %vm29, %v20, 0
  %vm33 = vcmask 1042432
  %v35 = vsel %vm33, %v21, 0
  %37 = vmatprep.subr.mxu0 0.0
  %38 = vmatpush1.msra.mxu0 0.0
  %39 = vmatprep.subr.mxu0 0.0
  %40 = vmatpush1.msra.mxu0 0.0
  %41 = vmatprep.subr.mxu0 0.0
  %42 = vmatpush1.msra.mxu0 0.0
  %43 = vmatprep.subr.mxu0 0.0
  %44 = vmatpush1.msra.mxu0 0.0
  %45 = vmatprep.subr.mxu0 0.0
  %46 = vmatpush1.msra.mxu0 0.0
  %47 = vmatprep.subr.mxu0 0.0
  %48 = vmatpush1.msra.mxu0 0.0
  %49 = vmatprep.subr.mxu0 0.0
  %50 = vmatpush1.msra.mxu0 0.0
  %51 = vmatprep.subr.mxu0 0.0
  %52 = vmatpush1.msra.mxu0 0.0
  %53 = vmatprep.subr.mxu0 0.0
  %54 = vmatpush1.msra.mxu0 0.0
  %55 = vmatprep.subr.mxu0 0.0
  %56 = vmatpush1.msra.mxu0 0.0
  %57 = vmatprep.subr.mxu0 0.0
  %58 = vmatpush1.msra.mxu0 0.0
  %59 = vmatprep.subr.mxu0 0.0
  %60 = vmatpush1.msra.mxu0 0.0
  %61 = vmatprep.subr.mxu0 0.0
  %62 = vmatpush1.msra.mxu0 0.0
  %63 = vmatprep.subr.mxu0 0.0
  %64 = vmatpush1.msra.mxu0 0.0
  %65 = vmatprep.subr.mxu0 0.0
  %66 = vmatpush1.msra.mxu0 0.0
  %67 = vmatprep.subr.mxu0 0.0
  %68 = vmatpush1.msra.mxu0 %v35
  %69 = vmatprep.subr.mxu0 0.0
  %70 = vmatpush2.msra.mxu0 0.0
  %71 = vmatprep.subr.mxu0 0.0
  %72 = vmatpush2.msra.mxu0 0.0
  %73 = vmatprep.subr.mxu0 0.0
  %74 = vmatpush2.msra.mxu0 0.0
  %75 = vmatprep.subr.mxu0 0.0
  %76 = vmatpush2.msra.mxu0 0.0
  %77 = vmatprep.subr.mxu0 0.0
  %78 = vmatpush2.msra.mxu0 0.0
  %79 = vmatprep.subr.mxu0 0.0
  %80 = vmatpush2.msra.mxu0 0.0
  %81 = vmatprep.subr.mxu0 0.0
  %82 = vmatpush2.msra.mxu0 0.0
  %83 = vmatprep.subr.mxu0 0.0
  %84 = vmatpush2.msra.mxu0 0.0
  %85 = vmatprep.subr.mxu0 0.0
  %86 = vmatpush2.msra.mxu0 0.0
  %87 = vmatprep.subr.mxu0 0.0
  %88 = vmatpush2.msra.mxu0 0.0
  %89 = vmatprep.subr.mxu0 0.0
  %90 = vmatpush2.msra.mxu0 0.0
  %91 = vmatprep.subr.mxu0 0.0
  %92 = vmatpush2.msra.mxu0 0.0
  %93 = vmatprep.subr.mxu0 0.0
  %94 = vmatpush2.msra.mxu0 0.0
  %95 = vmatprep.subr.mxu0 0.0
  %96 = vmatpush2.msra.mxu0 0.0
  %97 = vmatprep.subr.mxu0 0.0
  %98 = vmatpush2.msra.mxu0 0.0
  %99 = vmatprep.subr.mxu0 0.0
  %100 = vmatpush2.msra.mxu0 0.0
  %101 = vmatprep.mubr.f32.mxu0 0.0
  %102 = vmatmul.mubr.f32.gmra.mxu0 %v31
  %v103 = vpop.f32.mrf.mxu0
  %v104 = vadd.f32 %v27, %v103
  %v105 = vpop.f32.mrf.mxu0
  %106 = vdwg.mxu0
  %v107 = vmax.f32 %v104, 0.0
  %v108 = vld [vmem:[%s3] sm:$0xff]
  %v109 = vld [vmem:[%s3 + $0x8] sm:$0xff]
  %v110 = vld [vmem:[%s3 + $0x10] sm:$0xff]
  %v111 = vld [vmem:[%s3 + $0x18] sm:$0xff]
  %v112 = vld [vmem:[%s3 + $0x20] sm:$0xff]
  %v113 = vld [vmem:[%s3 + $0x28] sm:$0xff]
  %v114 = vld [vmem:[%s3 + $0x30] sm:$0xff]
  %v115 = vld [vmem:[%s3 + $0x38] sm:$0xff]
  %v116 = vld [vmem:[%s3 + $0x40] sm:$0xff]
  %v117 = vld [vmem:[%s3 + $0x48] sm:$0xff]
  %v118 = vld [vmem:[%s3 + $0x50] sm:$0xff]
  %v119 = vld [vmem:[%s3 + $0x58] sm:$0xff]
  %v120 = vld [vmem:[%s3 + $0x60] sm:$0xff]
  %v121 = vld [vmem:[%s3 + $0x68] sm:$0xff]
  %v122 = vld [vmem:[%s3 + $0x70] sm:$0xff]
  %v123 = vld [vmem:[%s3 + $0x78] sm:$0xff]
  %v124 = vld [vmem:[%s4] sm:$0x1]
  %v126 = vlaneseq
  %v127 = vshrl.u32 %v126, 7
  %v128 = vsub.s32 0, %v127
  %v129 = vrot.slane %v124, %v128
  %131 = vmatprep.subr.mxu0 0.0
  %132 = vmatpush1.msra.mxu0 %v123
  %133 = vmatprep.subr.mxu0 0.0
  %134 = vmatpush1.msra.mxu0 %v122
  %135 = vmatprep.subr.mxu0 0.0
  %136 = vmatpush1.msra.mxu0 %v121
  %137 = vmatprep.subr.mxu0 0.0
  %138 = vmatpush1.msra.mxu0 %v120
  %139 = vmatprep.subr.mxu0 0.0
  %140 = vmatpush1.msra.mxu0 %v119
  %141 = vmatprep.subr.mxu0 0.0
  %142 = vmatpush1.msra.mxu0 %v118
  %143 = vmatprep.subr.mxu0 0.0
  %144 = vmatpush1.msra.mxu0 %v117
  %145 = vmatprep.subr.mxu0 0.0
  %146 = vmatpush1.msra.mxu0 %v116
  %147 = vmatprep.subr.mxu0 0.0
  %148 = vmatpush1.msra.mxu0 %v115
  %149 = vmatprep.subr.mxu0 0.0
  %150 = vmatpush1.msra.mxu0 %v114
  %151 = vmatprep.subr.mxu0 0.0
  %152 = vmatpush1.msra.mxu0 %v113
  %153 = vmatprep.subr.mxu0 0.0
  %154 = vmatpush1.msra.mxu0 %v112
  %155 = vmatprep.subr.mxu0 0.0
  %156 = vmatpush1.msra.mxu0 %v111
  %157 = vmatprep.subr.mxu0 0.0
  %158 = vmatpush1.msra.mxu0 %v110
  %159 = vmatprep.subr.mxu0 0.0
  %160 = vmatpush1.msra.mxu0 %v109
  %161 = vmatprep.subr.mxu0 0.0
  %162 = vmatpush1.msra.mxu0 %v108
  %163 = vmatprep.subr.mxu0 0.0
  %164 = vmatpush2.msra.mxu0 0.0
  %165 = vmatprep.subr.mxu0 0.0
  %166 = vmatpush2.msra.mxu0 0.0
  %167 = vmatprep.subr.mxu0 0.0
  %168 = vmatpush2.msra.mxu0 0.0
  %169 = vmatprep.subr.mxu0 0.0
  %170 = vmatpush2.msra.mxu0 0.0
  %171 = vmatprep.subr.mxu0 0.0
  %172 = vmatpush2.msra.mxu0 0.0
  %173 = vmatprep.subr.mxu0 0.0
  %174 = vmatpush2.msra.mxu0 0.0
  %175 = vmatprep.subr.mxu0 0.0
  %176 = vmatpush2.msra.mxu0 0.0
  %177 = vmatprep.subr.mxu0 0.0
  %178 = vmatpush2.msra.mxu0 0.0
  %179 = vmatprep.subr.mxu0 0.0
  %180 = vmatpush2.msra.mxu0 0.0
  %181 = vmatprep.subr.mxu0 0.0
  %182 = vmatpush2.msra.mxu0 0.0
  %183 = vmatprep.subr.mxu0 0.0
  %184 = vmatpush2.msra.mxu0 0.0
  %185 = vmatprep.subr.mxu0 0.0
  %186 = vmatpush2.msra.mxu0 0.0
  %187 = vmatprep.subr.mxu0 0.0
  %188 = vmatpush2.msra.mxu0 0.0
  %189 = vmatprep.subr.mxu0 0.0
  %190 = vmatpush2.msra.mxu0 0.0
  %191 = vmatprep.subr.mxu0 0.0
  %192 = vmatpush2.msra.mxu0 0.0
  %193 = vmatprep.subr.mxu0 0.0
  %194 = vmatpush2.msra.mxu0 0.0
  %195 = vmatprep.mubr.f32.mxu0 0.0
  %196 = vmatmul.mubr.f32.gmra.mxu0 %v107
  %v197 = vpop.f32.mrf.mxu0
  %v198 = vadd.f32 %v129, %v197
  %v199 = vpop.f32.mrf.mxu0
  %200 = vdwg.mxu0
  %v201 = vlaneseq
  %v202 = vand.u32 %v201, 127
  %v203 = vtanh.pop %v198
  %v204 = vmul.f32 %v203, 2.0
  %v205 = vmax.f32 %v198, 0.0
  %v206 = vsub.f32 0.0, %v198
  %vm207 = vcmp.ne.f32.partialorder %v206, %v206
  %v208 = vadd.f32 %v198, 0.0
  %v209 = vand.u32 2147483647, %v206
  %v210 = vsub.f32 0.0, %v209
  %v211 = vmul.f32 %v210, 1.442695
  %v212 = vpow.pop %v211
  %v213 = vadd.f32 %v212, 1.0
  %v214 = vlog2.pop %v213
  %v215 = vmul.f32 %v214, 0.6931472
  %v216 = vmul.f32 -0.5, %v212
  %v217 = vadd.f32 %v216, 1.0
  %v218 = vmul.f32 %v217, %v212
  %v219 = vand.u32 2147483647, %v212
  %vm220 = vcmp.lt.f32.partialorder %v219, 0.0004427343
  %v221 = vsel %vm220, %v218, %v215
  %v222 = vadd.f32 %v205, %v221
  %v223 = vsel %vm207, %v208, %v222
  %vm224 = vcmp.eq.s32.totalorder %v202, 0
  %v225 = vsel %vm224, %v204, %v223
  %vm226 = vcmask 15360
  %227 = vst.msk [vmem:[%s5] sm:$0xff] %vm226, %v225
  // Predicated region
  $region22: #{tpu_custom_call.1} parent=0 // pred_check
    _
  $region23: #{tpu_custom_call.1} parent=0 // pred_check_branch
    %229 = sbr.rel (0) target = $region25
  $region24: #{tpu_custom_call.1} parent=0 // pred_region
    _
  $region25: #{tpu_custom_call.1} parent=0 // pred_fallthru
    _
  // Predicated region
  $region26: #{tpu_custom_call.1} parent=0 // pred_check
    _
  $region27: #{tpu_custom_call.1} parent=0 // pred_check_branch
    %231 = sbr.rel (0) target = $region29
  $region28: #{tpu_custom_call.1} parent=0 // pred_region
    _
  $region29: #{tpu_custom_call.1} parent=0 // pred_fallthru
    _

</llo_original>
